<compile_context>
chip_gen: v6e
topology: v6e:2x2x1
jax: 0.10.0
libtpu: 0.0.40
codegen_flags: <defaults>
</compile_context>

<pallas_src>
import jax
import jax.numpy as jnp
from jax.experimental import pallas as pl
from jax.experimental.pallas import tpu as pltpu

LANE_PAD_MIN_D = 512              # pad fused out-dim to 128 lanes only if D >= this
VMEM_BUDGET = 40 * 1024 * 1024    # per-step working-set bound (safe on v7x 64 MiB)
VMEM_LIMIT = 48 * 1024 * 1024     # scoped VMEM limit (lifts v5e 16 MiB default)
TB_CAP = 2048                     # absolute cap on batch tile rows


def _round_up(x, m):
    return ((x + m - 1) // m) * m


def _choose_tb(B, D, n_pad):
    """Pick the batch tile: big (few grid steps), bounded by VMEM, >=2 steps for big B."""
    per_row = 2 * D * 4 + 2 * n_pad * 4                 # dbl-buffered x tile + out tile
    resident = 2 * (D * n_pad * 4 + n_pad * 4)          # fused W + b (dbl-buffered)
    rows_cap = max(8, (VMEM_BUDGET - resident) // per_row)
    rows_cap = max(8, (rows_cap // 8) * 8)
    if B <= 512:
        tb = _round_up(B, 8)                            # single step for small/medium B
    else:
        tb = _round_up(pl.cdiv(B, 2), 8)                # >=2 steps: v7x has 2 TCs
        tb = min(tb, TB_CAP)
    return int(min(tb, rows_cap))


def _multi_task_kernel(x_ref, w_ref, b_ref, o_ref):
    """Fused linear: o = x @ W_fused + b_fused."""
    o_ref[...] = (
        jnp.dot(
            x_ref[...], w_ref[...],
            preferred_element_type=jnp.float32,
            precision=jax.lax.Precision.HIGHEST,
        )
        + b_ref[...]                                    # (1, n_pad) broadcasts
    ).astype(o_ref.dtype)


def multi_task_forward(feature, w1, b1, w2, b2):
    """feature: (B, D); w1: (D, 1); b1: (1,); w2: (D, 2); b2: (2,).

    Returns (p_tIoU (B, 1), p_loc (B, 2)) matching the PyTorch fc1/fc2 heads.
    """
    B, D = feature.shape
    n1, n2 = w1.shape[1], w2.shape[1]
    n_out = n1 + n2                                      # = 3
    n_pad = 128 if D >= LANE_PAD_MIN_D else n_out        # lane-dense only if input-dominated

    # --- fuse the two heads (wrapper-side, negligible cost) -----------------
    w_fused = jnp.concatenate([w1, w2], axis=1)                     # (D, 3)
    b_fused = jnp.concatenate([b1, b2], axis=0).reshape(1, n_out)   # (1, 3)
    if n_pad != n_out:
        w_fused = jnp.pad(w_fused, ((0, 0), (0, n_pad - n_out)))
        b_fused = jnp.pad(b_fused, ((0, 0), (0, n_pad - n_out)))

    # --- batch tiling: no feature pad copy, cdiv grid with overhanging tail --
    tb = _choose_tb(B, D, n_pad)
    grid = (pl.cdiv(B, tb),)
    rows_streamed = grid[0] * tb                         # includes last-tile overhang

    cost = pl.CostEstimate(
        flops=2 * B * D * n_out,
        transcendentals=0,
        bytes_accessed=(
            rows_streamed * D * feature.dtype.itemsize   # feature read
            + (D * n_pad + n_pad) * 4                    # fused W + b (resident)
            + rows_streamed * n_pad * 4                  # output write
        ),
    )

    out = pl.pallas_call(
        _multi_task_kernel,
        out_shape=jax.ShapeDtypeStruct((B, n_pad), jnp.float32),
        grid=grid,
        in_specs=[
            pl.BlockSpec((tb, D), lambda i: (i, 0)),     # stream batch rows
            pl.BlockSpec((D, n_pad), lambda i: (0, 0)),  # fused weight, resident
            pl.BlockSpec((1, n_pad), lambda i: (0, 0)),  # fused bias, resident
        ],
        out_specs=pl.BlockSpec((tb, n_pad), lambda i: (i, 0)),
        compiler_params=pltpu.CompilerParams(
            dimension_semantics=("parallel",),           # shard batch across v7x TCs
            vmem_limit_bytes=VMEM_LIMIT,
        ),
        cost_estimate=cost,
    )(feature, w_fused, b_fused)

    p_tIoU = out[:, 0:n1]                                # head 1 -> (B, 1)
    p_loc = out[:, n1:n1 + n2]                           # head 2 -> (B, 2)
    return p_tIoU, p_loc


def init_params(key, n_input):
    """Deterministic init mirroring nn.Linear default U(-1/sqrt(in), 1/sqrt(in))."""
    k1, k2, k3, k4 = jax.random.split(key, 4)
    bound = 1.0 / jnp.sqrt(jnp.float32(n_input))
    w1 = jax.random.uniform(k1, (n_input, 1), jnp.float32, -bound, bound)
    b1 = jax.random.uniform(k2, (1,), jnp.float32, -bound, bound)
    w2 = jax.random.uniform(k3, (n_input, 2), jnp.float32, -bound, bound)
    b2 = jax.random.uniform(k4, (2,), jnp.float32, -bound, bound)
    return w1, b1, w2, b2


def _ref_forward(feature, w1, b1, w2, b2):
    hp = jax.lax.Precision.HIGHEST
    return (jnp.dot(feature, w1, precision=hp) + b1,
            jnp.dot(feature, w2, precision=hp) + b2)


if __name__ == "__main__":
    key = jax.random.PRNGKey(0)
    k_feat, k_param, k_feat2, k_param2, k_feat3, k_param3 = jax.random.split(key, 6)

    # --- 1) spec shape (B=8, D=32): narrow-output path, single-step grid ----
    B, n_input = 8, 32
    feature = jax.random.normal(k_feat, (B, n_input), jnp.float32)
    w1, b1, w2, b2 = init_params(k_param, n_input)
    p_tIoU, p_loc = multi_task_forward(feature, w1, b1, w2, b2)
    jax.block_until_ready((p_tIoU, p_loc))
    r_tIoU, r_loc = _ref_forward(feature, w1, b1, w2, b2)
    assert p_tIoU.shape == (B, 1) and p_loc.shape == (B, 2)
    assert jnp.allclose(p_tIoU, r_tIoU, atol=1e-5)
    assert jnp.allclose(p_loc, r_loc, atol=1e-5)

    # --- 2) B=1000, D=256: multi-step cdiv grid with overhanging last tile ---
    B2, D2 = 1000, 256
    feature2 = jax.random.normal(k_feat2, (B2, D2), jnp.float32)
    w1b, b1b, w2b, b2b = init_params(k_param2, D2)
    p1, p2 = multi_task_forward(feature2, w1b, b1b, w2b, b2b)
    jax.block_until_ready((p1, p2))
    r1, r2 = _ref_forward(feature2, w1b, b1b, w2b, b2b)
    assert p1.shape == (B2, 1) and p2.shape == (B2, 2)
    assert jnp.allclose(p1, r1, atol=1e-4)
    assert jnp.allclose(p2, r2, atol=1e-4)

    # --- 3) B=256, D=1024: large-D path with lane-dense (128-wide) output ----
    B3, D3 = 256, 1024
    feature3 = jax.random.normal(k_feat3, (B3, D3), jnp.float32)
    w1c, b1c, w2c, b2c = init_params(k_param3, D3)
    q1, q2 = multi_task_forward(feature3, w1c, b1c, w2c, b2c)
    jax.block_until_ready((q1, q2))
    s1, s2 = _ref_forward(feature3, w1c, b1c, w2c, b2c)
    assert q1.shape == (B3, 1) and q2.shape == (B3, 2)
    assert jnp.allclose(q1, s1, atol=1e-4)
    assert jnp.allclose(q2, s2, atol=1e-4)

    print("KERNEL_OK")
</pallas_src>

<mosaic_0001>
module attributes {stable_mosaic.version = 11 : i64} {
  func.func @_multi_task_kernel(%arg0: i32, %arg1: memref<8x32xf32, #tpu.memory_space<vmem>>, %arg2: memref<32x3xf32, #tpu.memory_space<vmem>>, %arg3: memref<1x3xf32, #tpu.memory_space<vmem>>, %arg4: memref<8x3xf32, #tpu.memory_space<vmem>>) attributes {dimension_semantics = [#tpu.dimension_semantics<parallel>], iteration_bounds = array<i64: 1>, scalar_prefetch = 0 : i64, scratch_operands = 0 : i64, tpu.core_type = #tpu.core_type<tc>, window_params = [{transform_indices = @transform_0, window_bounds = array<i64: 8, 32>}, {pipeline_mode = #tpu.pipeline_mode<synchronous>, transform_indices = @transform_1, window_bounds = array<i64: 32, 3>}, {pipeline_mode = #tpu.pipeline_mode<synchronous>, transform_indices = @transform_2, window_bounds = array<i64: 1, 3>}, {transform_indices = @transform_3, window_bounds = array<i64: 8, 3>}]} {
    %c0 = arith.constant 0 : index
    %c0_0 = arith.constant 0 : index
    %0 = vector.load %arg1[%c0, %c0_0] : memref<8x32xf32, #tpu.memory_space<vmem>>, vector<8x32xf32>
    %c0_1 = arith.constant 0 : index
    %c0_2 = arith.constant 0 : index
    %1 = vector.load %arg2[%c0_1, %c0_2] : memref<32x3xf32, #tpu.memory_space<vmem>>, vector<32x3xf32>
    %cst = arith.constant dense<0.000000e+00> : vector<8x3xf32>
    %2 = tpu.matmul %0, %1, %cst {dimension_numbers = #tpu.dot_dimension_numbers<[1], [0], [0], [1], [0, 0, 1, 1], [], []>, precision = #tpu.contract_precision<fp32>} : vector<8x32xf32>, vector<32x3xf32>, vector<8x3xf32> -> vector<8x3xf32>
    %c0_3 = arith.constant 0 : index
    %c0_4 = arith.constant 0 : index
    %3 = vector.load %arg3[%c0_3, %c0_4] : memref<1x3xf32, #tpu.memory_space<vmem>>, vector<1x3xf32>
    %4 = vector.broadcast %3 : vector<1x3xf32> to vector<8x3xf32>
    %5 = arith.addf %2, %4 : vector<8x3xf32>
    %c0_5 = arith.constant 0 : index
    %c0_6 = arith.constant 0 : index
    %6 = vector.load %arg4[%c0_5, %c0_6] : memref<8x3xf32, #tpu.memory_space<vmem>>, vector<8x3xf32>
    tpu.vector_store %arg4[%c0_5, %c0_6], %5 {strides = array<i32>} : memref<8x3xf32, #tpu.memory_space<vmem>>, vector<8x3xf32>,
    return
  }
  func.func @transform_0(%arg0: i32) -> (i32, i32) {
    %c0_i32 = arith.constant 0 : i32
    %c0_i32_0 = arith.constant 0 : i32
    return %arg0, %c0_i32 : i32, i32
  }
  func.func @transform_1(%arg0: i32) -> (i32, i32) {
    %c0_i32 = arith.constant 0 : i32
    %c0_i32_0 = arith.constant 0 : i32
    %c0_i32_1 = arith.constant 0 : i32
    return %c0_i32, %c0_i32_0 : i32, i32
  }
  func.func @transform_2(%arg0: i32) -> (i32, i32) {
    %c0_i32 = arith.constant 0 : i32
    %c0_i32_0 = arith.constant 0 : i32
    %c0_i32_1 = arith.constant 0 : i32
    return %c0_i32, %c0_i32_0 : i32, i32
  }
  func.func @transform_3(%arg0: i32) -> (i32, i32) {
    %c0_i32 = arith.constant 0 : i32
    %c0_i32_0 = arith.constant 0 : i32
    return %arg0, %c0_i32 : i32, i32
  }
}

</mosaic_0001>

<llo_original>
// kernel: tpu_custom_call.1
$region0: #{tpu_custom_call.1}
  #allocation0 [shape = 'u32[]', space=smem, size = 0x4, offset = 0x4, fixed_abs, tag = 'smem constant byte address 0x4 - core index']
  #allocation1 [shape = 'u32[144,128]{1,0:T(1,128)}', space=vmem, size = 0x12000, scoped, tag = 'internal scratch']
  %s0 = inlined_call_operand.vmem [shape: f32[8,32], index: 0, kind: input, shape index: {}]
  %s1 = inlined_call_operand.vmem [shape: f32[32,3], index: 1, kind: input, shape index: {}]
  %s2 = inlined_call_operand.vmem [shape: f32[1,3], index: 2, kind: input, shape index: {}]
  %s3 = inlined_call_operand.vmem [shape: f32[8,3], index: 3, kind: output, shape index: {}]
  %s4 = sld [smem:[#allocation0]]
  $region22: #{tpu_custom_call.1} parent=0
    _
  %s6 = ssub.s32 1, %s4
  %s7 = scalar_select 0, %s6, %s4
  // Predicated region
  $region2: #{tpu_custom_call.1} parent=0 // pred_check
    _
  $region3: #{tpu_custom_call.1} parent=0 // pred_check_branch
    %9 = sbr.rel (0) target = $region5
  $region4: #{tpu_custom_call.1} parent=0 // pred_region
    _
  $region5: #{tpu_custom_call.1} parent=0 // pred_fallthru
    _
  // Predicated region
  $region6: #{tpu_custom_call.1} parent=0 // pred_check
    _
  $region7: #{tpu_custom_call.1} parent=0 // pred_check_branch
    %11 = sbr.rel (0) target = $region9
  $region8: #{tpu_custom_call.1} parent=0 // pred_region
    _
  $region9: #{tpu_custom_call.1} parent=0 // pred_fallthru
    _
  // Predicated region
  $region10: #{tpu_custom_call.1} parent=0 // pred_check
    _
  $region11: #{tpu_custom_call.1} parent=0 // pred_check_branch
    %13 = sbr.rel (0) target = $region13
  $region12: #{tpu_custom_call.1} parent=0 // pred_region
    _
  $region13: #{tpu_custom_call.1} parent=0 // pred_fallthru
    _
  %v14 = vld [vmem:[%s0] sm:$0xff]
  %v15 = vld [vmem:[%s1] sm:$0xff]
  %v16 = vld [vmem:[%s1 + $0x8] sm:$0xff]
  %v17 = vld [vmem:[%s1 + $0x10] sm:$0xff]
  %v18 = vld [vmem:[%s1 + $0x18] sm:$0xff]
  %v19 = vld [vmem:[%s2] sm:$0x1]
  %v21 = vlaneseq
  %v22 = vshrl.u32 %v21, 7
  %v23 = vsub.s32 0, %v22
  %v24 = vrot.slane %v19, %v23
  %vm26 = vcmask 261120
  %v28 = vsel %vm26, %v14, 0
  %30 = vmatprep.subr.mxu0 0.0
  %31 = vmatpush1.msra.mxu0 0.0
  %32 = vmatprep.subr.mxu0 0.0
  %33 = vmatpush1.msra.mxu0 0.0
  %34 = vmatprep.subr.mxu0 0.0
  %35 = vmatpush1.msra.mxu0 0.0
  %36 = vmatprep.subr.mxu0 0.0
  %37 = vmatpush1.msra.mxu0 0.0
  %38 = vmatprep.subr.mxu0 0.0
  %39 = vmatpush1.msra.mxu0 0.0
  %40 = vmatprep.subr.mxu0 0.0
  %41 = vmatpush1.msra.mxu0 0.0
  %42 = vmatprep.subr.mxu0 0.0
  %43 = vmatpush1.msra.mxu0 0.0
  %44 = vmatprep.subr.mxu0 0.0
  %45 = vmatpush1.msra.mxu0 0.0
  %46 = vmatprep.subr.mxu0 0.0
  %47 = vmatpush1.msra.mxu0 0.0
  %48 = vmatprep.subr.mxu0 0.0
  %49 = vmatpush1.msra.mxu0 0.0
  %50 = vmatprep.subr.mxu0 0.0
  %51 = vmatpush1.msra.mxu0 0.0
  %52 = vmatprep.subr.mxu0 0.0
  %53 = vmatpush1.msra.mxu0 0.0
  %54 = vmatprep.subr.mxu0 0.0
  %v55 = vand.u32 %v18, 4294901760
  %56 = vmatpush1.msra.mxu0 %v55
  %57 = vmatprep.subr.mxu0 0.0
  %v58 = vand.u32 %v17, 4294901760
  %59 = vmatpush1.msra.mxu0 %v58
  %60 = vmatprep.subr.mxu0 0.0
  %v61 = vand.u32 %v16, 4294901760
  %62 = vmatpush1.msra.mxu0 %v61
  %63 = vmatprep.subr.mxu0 0.0
  %v64 = vand.u32 %v15, 4294901760
  %65 = vmatpush1.msra.mxu0 %v64
  %66 = vmatprep.subr.mxu0 0.0
  %67 = vmatpush2.msra.mxu0 0.0
  %68 = vmatprep.subr.mxu0 0.0
  %69 = vmatpush2.msra.mxu0 0.0
  %70 = vmatprep.subr.mxu0 0.0
  %71 = vmatpush2.msra.mxu0 0.0
  %72 = vmatprep.subr.mxu0 0.0
  %73 = vmatpush2.msra.mxu0 0.0
  %74 = vmatprep.subr.mxu0 0.0
  %75 = vmatpush2.msra.mxu0 0.0
  %76 = vmatprep.subr.mxu0 0.0
  %77 = vmatpush2.msra.mxu0 0.0
  %78 = vmatprep.subr.mxu0 0.0
  %79 = vmatpush2.msra.mxu0 0.0
  %80 = vmatprep.subr.mxu0 0.0
  %81 = vmatpush2.msra.mxu0 0.0
  %82 = vmatprep.subr.mxu0 0.0
  %83 = vmatpush2.msra.mxu0 0.0
  %84 = vmatprep.subr.mxu0 0.0
  %85 = vmatpush2.msra.mxu0 0.0
  %86 = vmatprep.subr.mxu0 0.0
  %87 = vmatpush2.msra.mxu0 0.0
  %88 = vmatprep.subr.mxu0 0.0
  %89 = vmatpush2.msra.mxu0 0.0
  %90 = vmatprep.subr.mxu0 0.0
  %91 = vmatpush2.msra.mxu0 0.0
  %92 = vmatprep.subr.mxu0 0.0
  %93 = vmatpush2.msra.mxu0 0.0
  %94 = vmatprep.subr.mxu0 0.0
  %95 = vmatpush2.msra.mxu0 0.0
  %96 = vmatprep.subr.mxu0 0.0
  %97 = vmatpush2.msra.mxu0 0.0
  %98 = vmatprep.mubr.f32.mxu0 0.0
  %v99 = vand.u32 %v28, 4294901760
  %v100 = vsub.f32 %v28, %v99
  %v101 = vand.u32 %v100, 4294901760
  %v102 = vsub.f32 %v100, %v101
  %v103 = vand.u32 %v102, 4294901760
  %104 = vmatmul.mubr.f32.gmra.mxu0 %v103
  %v105 = vpop.f32.mrf.mxu0
  %v106 = vadd.f32 %v24, %v105
  %v107 = vpop.f32.mrf.mxu0
  %108 = vdwg.mxu0
  %109 = vmatprep.subr.mxu0 0.0
  %110 = vmatpush1.msra.mxu0 0.0
  %111 = vmatprep.subr.mxu0 0.0
  %112 = vmatpush1.msra.mxu0 0.0
  %113 = vmatprep.subr.mxu0 0.0
  %114 = vmatpush1.msra.mxu0 0.0
  %115 = vmatprep.subr.mxu0 0.0
  %116 = vmatpush1.msra.mxu0 0.0
  %117 = vmatprep.subr.mxu0 0.0
  %118 = vmatpush1.msra.mxu0 0.0
  %119 = vmatprep.subr.mxu0 0.0
  %120 = vmatpush1.msra.mxu0 0.0
  %121 = vmatprep.subr.mxu0 0.0
  %122 = vmatpush1.msra.mxu0 0.0
  %123 = vmatprep.subr.mxu0 0.0
  %124 = vmatpush1.msra.mxu0 0.0
  %125 = vmatprep.subr.mxu0 0.0
  %126 = vmatpush1.msra.mxu0 0.0
  %127 = vmatprep.subr.mxu0 0.0
  %128 = vmatpush1.msra.mxu0 0.0
  %129 = vmatprep.subr.mxu0 0.0
  %130 = vmatpush1.msra.mxu0 0.0
  %131 = vmatprep.subr.mxu0 0.0
  %132 = vmatpush1.msra.mxu0 0.0
  %133 = vmatprep.subr.mxu0 0.0
  %v134 = vand.u32 %v18, 4294901760
  %v135 = vsub.f32 %v18, %v134
  %v136 = vand.u32 %v135, 4294901760
  %v137 = vsub.f32 %v135, %v136
  %v138 = vand.u32 %v137, 4294901760
  %139 = vmatpush1.msra.mxu0 %v138
  %140 = vmatprep.subr.mxu0 0.0
  %v141 = vand.u32 %v17, 4294901760
  %v142 = vsub.f32 %v17, %v141
  %v143 = vand.u32 %v142, 4294901760
  %v144 = vsub.f32 %v142, %v143
  %v145 = vand.u32 %v144, 4294901760
  %146 = vmatpush1.msra.mxu0 %v145
  %147 = vmatprep.subr.mxu0 0.0
  %v148 = vand.u32 %v16, 4294901760
  %v149 = vsub.f32 %v16, %v148
  %v150 = vand.u32 %v149, 4294901760
  %v151 = vsub.f32 %v149, %v150
  %v152 = vand.u32 %v151, 4294901760
  %153 = vmatpush1.msra.mxu0 %v152
  %154 = vmatprep.subr.mxu0 0.0
  %v155 = vand.u32 %v15, 4294901760
  %v156 = vsub.f32 %v15, %v155
  %v157 = vand.u32 %v156, 4294901760
  %v158 = vsub.f32 %v156, %v157
  %v159 = vand.u32 %v158, 4294901760
  %160 = vmatpush1.msra.mxu0 %v159
  %161 = vmatprep.subr.mxu0 0.0
  %162 = vmatpush2.msra.mxu0 0.0
  %163 = vmatprep.subr.mxu0 0.0
  %164 = vmatpush2.msra.mxu0 0.0
  %165 = vmatprep.subr.mxu0 0.0
  %166 = vmatpush2.msra.mxu0 0.0
  %167 = vmatprep.subr.mxu0 0.0
  %168 = vmatpush2.msra.mxu0 0.0
  %169 = vmatprep.subr.mxu0 0.0
  %170 = vmatpush2.msra.mxu0 0.0
  %171 = vmatprep.subr.mxu0 0.0
  %172 = vmatpush2.msra.mxu0 0.0
  %173 = vmatprep.subr.mxu0 0.0
  %174 = vmatpush2.msra.mxu0 0.0
  %175 = vmatprep.subr.mxu0 0.0
  %176 = vmatpush2.msra.mxu0 0.0
  %177 = vmatprep.subr.mxu0 0.0
  %178 = vmatpush2.msra.mxu0 0.0
  %179 = vmatprep.subr.mxu0 0.0
  %180 = vmatpush2.msra.mxu0 0.0
  %181 = vmatprep.subr.mxu0 0.0
  %182 = vmatpush2.msra.mxu0 0.0
  %183 = vmatprep.subr.mxu0 0.0
  %184 = vmatpush2.msra.mxu0 0.0
  %185 = vmatprep.subr.mxu0 0.0
  %186 = vmatpush2.msra.mxu0 0.0
  %187 = vmatprep.subr.mxu0 0.0
  %188 = vmatpush2.msra.mxu0 0.0
  %189 = vmatprep.subr.mxu0 0.0
  %190 = vmatpush2.msra.mxu0 0.0
  %191 = vmatprep.subr.mxu0 0.0
  %192 = vmatpush2.msra.mxu0 0.0
  %193 = vmatprep.mubr.f32.mxu0 0.0
  %v194 = vand.u32 %v28, 4294901760
  %195 = vmatmul.mubr.f32.gmra.mxu0 %v194
  %v196 = vpop.f32.mrf.mxu0
  %v197 = vadd.f32 %v106, %v196
  %v198 = vpop.f32.mrf.mxu0
  %199 = vdwg.mxu0
  %200 = vmatprep.subr.mxu0 0.0
  %201 = vmatpush1.msra.mxu0 0.0
  %202 = vmatprep.subr.mxu0 0.0
  %203 = vmatpush1.msra.mxu0 0.0
  %204 = vmatprep.subr.mxu0 0.0
  %205 = vmatpush1.msra.mxu0 0.0
  %206 = vmatprep.subr.mxu0 0.0
  %207 = vmatpush1.msra.mxu0 0.0
  %208 = vmatprep.subr.mxu0 0.0
  %209 = vmatpush1.msra.mxu0 0.0
  %210 = vmatprep.subr.mxu0 0.0
  %211 = vmatpush1.msra.mxu0 0.0
  %212 = vmatprep.subr.mxu0 0.0
  %213 = vmatpush1.msra.mxu0 0.0
  %214 = vmatprep.subr.mxu0 0.0
  %215 = vmatpush1.msra.mxu0 0.0
  %216 = vmatprep.subr.mxu0 0.0
  %217 = vmatpush1.msra.mxu0 0.0
  %218 = vmatprep.subr.mxu0 0.0
  %219 = vmatpush1.msra.mxu0 0.0
  %220 = vmatprep.subr.mxu0 0.0
  %221 = vmatpush1.msra.mxu0 0.0
  %222 = vmatprep.subr.mxu0 0.0
  %223 = vmatpush1.msra.mxu0 0.0
  %224 = vmatprep.subr.mxu0 0.0
  %v225 = vand.u32 %v18, 4294901760
  %v226 = vsub.f32 %v18, %v225
  %227 = vmatpush1.msra.mxu0 %v226
  %228 = vmatprep.subr.mxu0 0.0
  %v229 = vand.u32 %v17, 4294901760
  %v230 = vsub.f32 %v17, %v229
  %231 = vmatpush1.msra.mxu0 %v230
  %232 = vmatprep.subr.mxu0 0.0
  %v233 = vand.u32 %v16, 4294901760
  %v234 = vsub.f32 %v16, %v233
  %235 = vmatpush1.msra.mxu0 %v234
  %236 = vmatprep.subr.mxu0 0.0
  %v237 = vand.u32 %v15, 4294901760
  %v238 = vsub.f32 %v15, %v237
  %239 = vmatpush1.msra.mxu0 %v238
  %240 = vmatprep.subr.mxu0 0.0
  %241 = vmatpush2.msra.mxu0 0.0
  %242 = vmatprep.subr.mxu0 0.0
  %243 = vmatpush2.msra.mxu0 0.0
  %244 = vmatprep.subr.mxu0 0.0
  %245 = vmatpush2.msra.mxu0 0.0
  %246 = vmatprep.subr.mxu0 0.0
  %247 = vmatpush2.msra.mxu0 0.0
  %248 = vmatprep.subr.mxu0 0.0
  %249 = vmatpush2.msra.mxu0 0.0
  %250 = vmatprep.subr.mxu0 0.0
  %251 = vmatpush2.msra.mxu0 0.0
  %252 = vmatprep.subr.mxu0 0.0
  %253 = vmatpush2.msra.mxu0 0.0
  %254 = vmatprep.subr.mxu0 0.0
  %255 = vmatpush2.msra.mxu0 0.0
  %256 = vmatprep.subr.mxu0 0.0
  %257 = vmatpush2.msra.mxu0 0.0
  %258 = vmatprep.subr.mxu0 0.0
  %259 = vmatpush2.msra.mxu0 0.0
  %260 = vmatprep.subr.mxu0 0.0
  %261 = vmatpush2.msra.mxu0 0.0
  %262 = vmatprep.subr.mxu0 0.0
  %263 = vmatpush2.msra.mxu0 0.0
  %264 = vmatprep.subr.mxu0 0.0
  %265 = vmatpush2.msra.mxu0 0.0
  %266 = vmatprep.subr.mxu0 0.0
  %267 = vmatpush2.msra.mxu0 0.0
  %268 = vmatprep.subr.mxu0 0.0
  %269 = vmatpush2.msra.mxu0 0.0
  %270 = vmatprep.subr.mxu0 0.0
  %271 = vmatpush2.msra.mxu0 0.0
  %272 = vmatprep.mubr.f32.mxu0 0.0
  %v273 = vand.u32 %v28, 4294901760
  %v274 = vsub.f32 %v28, %v273
  %275 = vmatmul.mubr.f32.gmra.mxu0 %v274
  %v276 = vpop.f32.mrf.mxu0
  %v277 = vadd.f32 %v197, %v276
  %v278 = vpop.f32.mrf.mxu0
  %279 = vdwg.mxu0
  %280 = vmatprep.subr.mxu0 0.0
  %281 = vmatpush1.msra.mxu0 0.0
  %282 = vmatprep.subr.mxu0 0.0
  %283 = vmatpush1.msra.mxu0 0.0
  %284 = vmatprep.subr.mxu0 0.0
  %285 = vmatpush1.msra.mxu0 0.0
  %286 = vmatprep.subr.mxu0 0.0
  %287 = vmatpush1.msra.mxu0 0.0
  %288 = vmatprep.subr.mxu0 0.0
  %289 = vmatpush1.msra.mxu0 0.0
  %290 = vmatprep.subr.mxu0 0.0
  %291 = vmatpush1.msra.mxu0 0.0
  %292 = vmatprep.subr.mxu0 0.0
  %293 = vmatpush1.msra.mxu0 0.0
  %294 = vmatprep.subr.mxu0 0.0
  %295 = vmatpush1.msra.mxu0 0.0
  %296 = vmatprep.subr.mxu0 0.0
  %297 = vmatpush1.msra.mxu0 0.0
  %298 = vmatprep.subr.mxu0 0.0
  %299 = vmatpush1.msra.mxu0 0.0
  %300 = vmatprep.subr.mxu0 0.0
  %301 = vmatpush1.msra.mxu0 0.0
  %302 = vmatprep.subr.mxu0 0.0
  %303 = vmatpush1.msra.mxu0 0.0
  %304 = vmatprep.subr.mxu0 0.0
  %v305 = vand.u32 %v18, 4294901760
  %306 = vmatpush1.msra.mxu0 %v305
  %307 = vmatprep.subr.mxu0 0.0
  %v308 = vand.u32 %v17, 4294901760
  %309 = vmatpush1.msra.mxu0 %v308
  %310 = vmatprep.subr.mxu0 0.0
  %v311 = vand.u32 %v16, 4294901760
  %312 = vmatpush1.msra.mxu0 %v311
  %313 = vmatprep.subr.mxu0 0.0
  %v314 = vand.u32 %v15, 4294901760
  %315 = vmatpush1.msra.mxu0 %v314
  %316 = vmatprep.subr.mxu0 0.0
  %317 = vmatpush2.msra.mxu0 0.0
  %318 = vmatprep.subr.mxu0 0.0
  %319 = vmatpush2.msra.mxu0 0.0
  %320 = vmatprep.subr.mxu0 0.0
  %321 = vmatpush2.msra.mxu0 0.0
  %322 = vmatprep.subr.mxu0 0.0
  %323 = vmatpush2.msra.mxu0 0.0
  %324 = vmatprep.subr.mxu0 0.0
  %325 = vmatpush2.msra.mxu0 0.0
  %326 = vmatprep.subr.mxu0 0.0
  %327 = vmatpush2.msra.mxu0 0.0
  %328 = vmatprep.subr.mxu0 0.0
  %329 = vmatpush2.msra.mxu0 0.0
  %330 = vmatprep.subr.mxu0 0.0
  %331 = vmatpush2.msra.mxu0 0.0
  %332 = vmatprep.subr.mxu0 0.0
  %333 = vmatpush2.msra.mxu0 0.0
  %334 = vmatprep.subr.mxu0 0.0
  %335 = vmatpush2.msra.mxu0 0.0
  %336 = vmatprep.subr.mxu0 0.0
  %337 = vmatpush2.msra.mxu0 0.0
  %338 = vmatprep.subr.mxu0 0.0
  %339 = vmatpush2.msra.mxu0 0.0
  %340 = vmatprep.subr.mxu0 0.0
  %341 = vmatpush2.msra.mxu0 0.0
  %342 = vmatprep.subr.mxu0 0.0
  %343 = vmatpush2.msra.mxu0 0.0
  %344 = vmatprep.subr.mxu0 0.0
  %345 = vmatpush2.msra.mxu0 0.0
  %346 = vmatprep.subr.mxu0 0.0
  %347 = vmatpush2.msra.mxu0 0.0
  %348 = vmatprep.mubr.f32.mxu0 0.0
  %v349 = vand.u32 %v28, 4294901760
  %v350 = vsub.f32 %v28, %v349
  %v351 = vand.u32 %v350, 4294901760
  %352 = vmatmul.mubr.f32.gmra.mxu0 %v351
  %v353 = vpop.f32.mrf.mxu0
  %v354 = vadd.f32 %v277, %v353
  %v355 = vpop.f32.mrf.mxu0
  %356 = vdwg.mxu0
  %357 = vmatprep.subr.mxu0 0.0
  %358 = vmatpush1.msra.mxu0 0.0
  %359 = vmatprep.subr.mxu0 0.0
  %360 = vmatpush1.msra.mxu0 0.0
  %361 = vmatprep.subr.mxu0 0.0
  %362 = vmatpush1.msra.mxu0 0.0
  %363 = vmatprep.subr.mxu0 0.0
  %364 = vmatpush1.msra.mxu0 0.0
  %365 = vmatprep.subr.mxu0 0.0
  %366 = vmatpush1.msra.mxu0 0.0
  %367 = vmatprep.subr.mxu0 0.0
  %368 = vmatpush1.msra.mxu0 0.0
  %369 = vmatprep.subr.mxu0 0.0
  %370 = vmatpush1.msra.mxu0 0.0
  %371 = vmatprep.subr.mxu0 0.0
  %372 = vmatpush1.msra.mxu0 0.0
  %373 = vmatprep.subr.mxu0 0.0
  %374 = vmatpush1.msra.mxu0 0.0
  %375 = vmatprep.subr.mxu0 0.0
  %376 = vmatpush1.msra.mxu0 0.0
  %377 = vmatprep.subr.mxu0 0.0
  %378 = vmatpush1.msra.mxu0 0.0
  %379 = vmatprep.subr.mxu0 0.0
  %380 = vmatpush1.msra.mxu0 0.0
  %381 = vmatprep.subr.mxu0 0.0
  %v382 = vand.u32 %v18, 4294901760
  %v383 = vsub.f32 %v18, %v382
  %v384 = vand.u32 %v383, 4294901760
  %385 = vmatpush1.msra.mxu0 %v384
  %386 = vmatprep.subr.mxu0 0.0
  %v387 = vand.u32 %v17, 4294901760
  %v388 = vsub.f32 %v17, %v387
  %v389 = vand.u32 %v388, 4294901760
  %390 = vmatpush1.msra.mxu0 %v389
  %391 = vmatprep.subr.mxu0 0.0
  %v392 = vand.u32 %v16, 4294901760
  %v393 = vsub.f32 %v16, %v392
  %v394 = vand.u32 %v393, 4294901760
  %395 = vmatpush1.msra.mxu0 %v394
  %396 = vmatprep.subr.mxu0 0.0
  %v397 = vand.u32 %v15, 4294901760
  %v398 = vsub.f32 %v15, %v397
  %v399 = vand.u32 %v398, 4294901760
  %400 = vmatpush1.msra.mxu0 %v399
  %401 = vmatprep.subr.mxu0 0.0
  %402 = vmatpush2.msra.mxu0 0.0
  %403 = vmatprep.subr.mxu0 0.0
  %404 = vmatpush2.msra.mxu0 0.0
  %405 = vmatprep.subr.mxu0 0.0
  %406 = vmatpush2.msra.mxu0 0.0
  %407 = vmatprep.subr.mxu0 0.0
  %408 = vmatpush2.msra.mxu0 0.0
  %409 = vmatprep.subr.mxu0 0.0
  %410 = vmatpush2.msra.mxu0 0.0
  %411 = vmatprep.subr.mxu0 0.0
  %412 = vmatpush2.msra.mxu0 0.0
  %413 = vmatprep.subr.mxu0 0.0
  %414 = vmatpush2.msra.mxu0 0.0
  %415 = vmatprep.subr.mxu0 0.0
  %416 = vmatpush2.msra.mxu0 0.0
  %417 = vmatprep.subr.mxu0 0.0
  %418 = vmatpush2.msra.mxu0 0.0
  %419 = vmatprep.subr.mxu0 0.0
  %420 = vmatpush2.msra.mxu0 0.0
  %421 = vmatprep.subr.mxu0 0.0
  %422 = vmatpush2.msra.mxu0 0.0
  %423 = vmatprep.subr.mxu0 0.0
  %424 = vmatpush2.msra.mxu0 0.0
  %425 = vmatprep.subr.mxu0 0.0
  %426 = vmatpush2.msra.mxu0 0.0
  %427 = vmatprep.subr.mxu0 0.0
  %428 = vmatpush2.msra.mxu0 0.0
  %429 = vmatprep.subr.mxu0 0.0
  %430 = vmatpush2.msra.mxu0 0.0
  %431 = vmatprep.subr.mxu0 0.0
  %432 = vmatpush2.msra.mxu0 0.0
  %433 = vmatprep.mubr.f32.mxu0 0.0
  %v434 = vand.u32 %v28, 4294901760
  %435 = vmatmul.mubr.f32.gmra.mxu0 %v434
  %v436 = vpop.f32.mrf.mxu0
  %v437 = vadd.f32 %v354, %v436
  %v438 = vpop.f32.mrf.mxu0
  %439 = vdwg.mxu0
  %440 = vmatprep.subr.mxu0 0.0
  %441 = vmatpush1.msra.mxu0 0.0
  %442 = vmatprep.subr.mxu0 0.0
  %443 = vmatpush1.msra.mxu0 0.0
  %444 = vmatprep.subr.mxu0 0.0
  %445 = vmatpush1.msra.mxu0 0.0
  %446 = vmatprep.subr.mxu0 0.0
  %447 = vmatpush1.msra.mxu0 0.0
  %448 = vmatprep.subr.mxu0 0.0
  %449 = vmatpush1.msra.mxu0 0.0
  %450 = vmatprep.subr.mxu0 0.0
  %451 = vmatpush1.msra.mxu0 0.0
  %452 = vmatprep.subr.mxu0 0.0
  %453 = vmatpush1.msra.mxu0 0.0
  %454 = vmatprep.subr.mxu0 0.0
  %455 = vmatpush1.msra.mxu0 0.0
  %456 = vmatprep.subr.mxu0 0.0
  %457 = vmatpush1.msra.mxu0 0.0
  %458 = vmatprep.subr.mxu0 0.0
  %459 = vmatpush1.msra.mxu0 0.0
  %460 = vmatprep.subr.mxu0 0.0
  %461 = vmatpush1.msra.mxu0 0.0
  %462 = vmatprep.subr.mxu0 0.0
  %463 = vmatpush1.msra.mxu0 0.0
  %464 = vmatprep.subr.mxu0 0.0
  %v465 = vand.u32 %v18, 4294901760
  %466 = vmatpush1.msra.mxu0 %v465
  %467 = vmatprep.subr.mxu0 0.0
  %v468 = vand.u32 %v17, 4294901760
  %469 = vmatpush1.msra.mxu0 %v468
  %470 = vmatprep.subr.mxu0 0.0
  %v471 = vand.u32 %v16, 4294901760
  %472 = vmatpush1.msra.mxu0 %v471
  %473 = vmatprep.subr.mxu0 0.0
  %v474 = vand.u32 %v15, 4294901760
  %475 = vmatpush1.msra.mxu0 %v474
  %476 = vmatprep.subr.mxu0 0.0
  %477 = vmatpush2.msra.mxu0 0.0
  %478 = vmatprep.subr.mxu0 0.0
  %479 = vmatpush2.msra.mxu0 0.0
  %480 = vmatprep.subr.mxu0 0.0
  %481 = vmatpush2.msra.mxu0 0.0
  %482 = vmatprep.subr.mxu0 0.0
  %483 = vmatpush2.msra.mxu0 0.0
  %484 = vmatprep.subr.mxu0 0.0
  %485 = vmatpush2.msra.mxu0 0.0
  %486 = vmatprep.subr.mxu0 0.0
  %487 = vmatpush2.msra.mxu0 0.0
  %488 = vmatprep.subr.mxu0 0.0
  %489 = vmatpush2.msra.mxu0 0.0
  %490 = vmatprep.subr.mxu0 0.0
  %491 = vmatpush2.msra.mxu0 0.0
  %492 = vmatprep.subr.mxu0 0.0
  %493 = vmatpush2.msra.mxu0 0.0
  %494 = vmatprep.subr.mxu0 0.0
  %495 = vmatpush2.msra.mxu0 0.0
  %496 = vmatprep.subr.mxu0 0.0
  %497 = vmatpush2.msra.mxu0 0.0
  %498 = vmatprep.subr.mxu0 0.0
  %499 = vmatpush2.msra.mxu0 0.0
  %500 = vmatprep.subr.mxu0 0.0
  %501 = vmatpush2.msra.mxu0 0.0
  %502 = vmatprep.subr.mxu0 0.0
  %503 = vmatpush2.msra.mxu0 0.0
  %504 = vmatprep.subr.mxu0 0.0
  %505 = vmatpush2.msra.mxu0 0.0
  %506 = vmatprep.subr.mxu0 0.0
  %507 = vmatpush2.msra.mxu0 0.0
  %508 = vmatprep.mubr.f32.mxu0 0.0
  %v509 = vand.u32 %v28, 4294901760
  %510 = vmatmul.mubr.f32.gmra.mxu0 %v509
  %v511 = vpop.f32.mrf.mxu0
  %v512 = vadd.f32 %v437, %v511
  %v513 = vpop.f32.mrf.mxu0
  %514 = vdwg.mxu0
  %vm515 = vcmask 23552
  %516 = vst.msk [vmem:[%s3] sm:$0xff] %vm515, %v512
  // Predicated region
  $region14: #{tpu_custom_call.1} parent=0 // pred_check
    _
  $region15: #{tpu_custom_call.1} parent=0 // pred_check_branch
    %518 = sbr.rel (0) target = $region17
  $region16: #{tpu_custom_call.1} parent=0 // pred_region
    _
  $region17: #{tpu_custom_call.1} parent=0 // pred_fallthru
    _
  // Predicated region
  $region18: #{tpu_custom_call.1} parent=0 // pred_check
    _
  $region19: #{tpu_custom_call.1} parent=0 // pred_check_branch
    %520 = sbr.rel (0) target = $region21
  $region20: #{tpu_custom_call.1} parent=0 // pred_region
    _
  $region21: #{tpu_custom_call.1} parent=0 // pred_fallthru
    _

</llo_original>
